<compile_context>
chip_gen: v7x
topology: tpu7x:2x2x1
jax: 0.10.0
libtpu: 0.0.40
codegen_flags: <defaults>
</compile_context>

<pallas_src>
import jax
import jax.numpy as jnp
from jax.experimental import pallas as pl
from jax.experimental.pallas import tpu as pltpu


def _round_up(v, m):
    return ((v + m - 1) // m) * m


def _round_down(v, m):
    return (v // m) * m


def code2vec_kernel(x_ref, w_ref, b_ref, out_ref):
    T = x_ref.shape[1]
    # Pool over the context axis first (Linear is affine, so mean commutes with it).
    # Accumulate the sum in f32 even when x arrives as bf16.
    pooled = jnp.sum(x_ref[...].astype(jnp.float32), axis=1) * (1.0 / T)   # (TB, F) f32

    # Single fused head: pooled @ (W1^T @ W2^T) + (b1 @ W2^T + b2), all f32.
    out = jnp.dot(pooled, w_ref[...], preferred_element_type=jnp.float32)  # (TB, L_pad)
    out = out + b_ref[...]
    out_ref[...] = out.astype(out_ref.dtype)


def code2vec_forward(x, w1_t, b1, w2_t, b2):
    """Fused Code2vecNet forward.

    x    : (B, T, F), f32 or bf16 (ship bf16 from the producer for ~2x on this
           HBM-bound kernel; the pooled sum still accumulates in f32).
    w1_t : (F, F)  == W1.T (PyTorch Linear weight transposed)
    b1   : (F,) or (1, F)
    w2_t : (F, L)  == W2.T
    b2   : (L,) or (1, L)
    """
    B, T, F = x.shape
    L = w2_t.shape[1]

    # --- fold the two Linears (no nonlinearity between them in the module) -----
    w_eff = jnp.asarray(w1_t, jnp.float32) @ jnp.asarray(w2_t, jnp.float32)      # (F, L)
    b_eff = jnp.asarray(b1, jnp.float32).reshape(1, F) @ jnp.asarray(w2_t, jnp.float32)
    b_eff = b_eff + jnp.asarray(b2, jnp.float32).reshape(1, L)                   # (1, L)

    # Lane-dense output head: pad L up to a multiple of 128 (>= 128).
    L_pad = max(128, _round_up(L, 128))
    w_eff_p = jnp.zeros((F, L_pad), jnp.float32).at[:, :L].set(w_eff)
    b_eff_p = jnp.zeros((1, L_pad), jnp.float32).at[:, :L].set(b_eff)

    # --- per-generation x-tile budget / scoped VMEM limit -----------------------
    try:
        vmem_cap = pltpu.get_tpu_info().vmem_capacity_bytes
    except Exception:
        vmem_cap = 0
    if vmem_cap >= 128 * 1024 * 1024:        # v5e / v6e: 128 MiB physical VMEM
        tile_budget = 16 * 1024 * 1024
        vmem_limit = 64 * 1024 * 1024
    elif vmem_cap >= 64 * 1024 * 1024:       # v7x: 64 MiB physical VMEM
        tile_budget = 12 * 1024 * 1024
        vmem_limit = 48 * 1024 * 1024
    else:                                    # unknown hardware: conservative
        tile_budget = 8 * 1024 * 1024
        vmem_limit = 32 * 1024 * 1024

    # --- batch tile: 128-aligned, sized to the budget, and split so the grid has
    # >= 2 steps for non-trivial B (keeps both v7x TensorCores busy) -------------
    bytes_per_batch_row = T * F * x.dtype.itemsize
    tb_budget = max(128, _round_down(tile_budget // bytes_per_batch_row, 128))
    if B <= tb_budget:
        if B > 256:
            TB = min(tb_budget, _round_up(pl.cdiv(B, 2), 128))  # >= 2 grid steps
        else:
            TB = B                            # tiny batch: one full-block step
    else:
        TB = tb_budget
    grid = (pl.cdiv(B, TB),)

    flops = 2 * B * F * L_pad + B * T * F
    bytes_accessed = (B * T * F * x.dtype.itemsize     # x (streamed)
                      + F * L_pad * 4 + L_pad * 4      # folded weight + bias
                      + B * L_pad * 4)                 # output

    out_padded = pl.pallas_call(
        code2vec_kernel,
        out_shape=jax.ShapeDtypeStruct((B, L_pad), jnp.float32),
        grid=grid,
        in_specs=[
            pl.BlockSpec((TB, T, F), lambda i: (i, 0, 0)),   # x tile (pipelined)
            pl.BlockSpec((F, L_pad), lambda i: (0, 0)),      # folded weight (resident)
            pl.BlockSpec((1, L_pad), lambda i: (0, 0)),      # folded bias (resident)
        ],
        out_specs=pl.BlockSpec((TB, L_pad), lambda i: (i, 0)),
        compiler_params=pltpu.CompilerParams(
            dimension_semantics=("parallel",),               # 2 TCs split batch on v7x
            vmem_limit_bytes=vmem_limit,
        ),
        cost_estimate=pl.CostEstimate(
            flops=flops, transcendentals=0, bytes_accessed=bytes_accessed),
    )(x, w_eff_p, b_eff_p)

    return out_padded[:, :L]


def reference_forward(x, w1_t, b1, w2_t, b2):
    # Matches PyTorch order exactly: Linear -> mean over dim 1 -> Linear, all f32.
    h = jnp.einsum("btf,fg->btg", x.astype(jnp.float32), w1_t) + b1.reshape(1, 1, -1)
    pooled = jnp.mean(h, axis=1)
    return pooled @ w2_t + b2.reshape(1, -1)


if __name__ == "__main__":
    feature_size = 384   # module default
    label_size = 1       # module default
    B, T = 2, 8          # small batch / number of path-contexts

    key = jax.random.PRNGKey(0)
    kx, kw1, kb1, kw2, kb2 = jax.random.split(key, 5)

    # PyTorch Linear weight is (out, in); we store the transpose (in, out) so the
    # math uses x @ W directly.
    x = jax.random.normal(kx, (B, T, feature_size), dtype=jnp.float32)
    w1_t = jax.random.normal(kw1, (feature_size, feature_size), dtype=jnp.float32) * 0.02
    b1 = jax.random.normal(kb1, (1, feature_size), dtype=jnp.float32) * 0.02
    w2_t = jax.random.normal(kw2, (feature_size, label_size), dtype=jnp.float32) * 0.02
    b2 = jax.random.normal(kb2, (1, label_size), dtype=jnp.float32) * 0.02

    ref = reference_forward(x, w1_t, b1, w2_t, b2)

    # f32 activation path: only reassociation (pool-first + weight folding) vs ref.
    out = jax.block_until_ready(code2vec_forward(x, w1_t, b1, w2_t, b2))
    assert out.shape == (B, label_size), out.shape
    assert jnp.allclose(out, ref, atol=2e-4, rtol=1e-3), (out, ref)

    # bf16 activation path (recommended production dtype for x; ~2x less HBM traffic).
    out_bf16 = jax.block_until_ready(
        code2vec_forward(x.astype(jnp.bfloat16), w1_t, b1, w2_t, b2))
    assert out_bf16.shape == (B, label_size), out_bf16.shape
    assert jnp.allclose(out_bf16, ref, atol=1e-2, rtol=5e-2), (out_bf16, ref)

    print("KERNEL_OK")
</pallas_src>

<mosaic_0001>
module attributes {stable_mosaic.version = 11 : i64} {
  func.func @code2vec_kernel(%arg0: i32, %arg1: memref<2x8x384xf32, #tpu.memory_space<vmem>>, %arg2: memref<384x128xf32, #tpu.memory_space<vmem>>, %arg3: memref<1x128xf32, #tpu.memory_space<vmem>>, %arg4: memref<2x128xf32, #tpu.memory_space<vmem>>) attributes {dimension_semantics = [#tpu.dimension_semantics<parallel>], iteration_bounds = array<i64: 1>, scalar_prefetch = 0 : i64, scratch_operands = 0 : i64, tpu.core_type = #tpu.core_type<tc>, window_params = [{transform_indices = @transform_0, window_bounds = array<i64: 2, 8, 384>}, {pipeline_mode = #tpu.pipeline_mode<synchronous>, transform_indices = @transform_1, window_bounds = array<i64: 384, 128>}, {pipeline_mode = #tpu.pipeline_mode<synchronous>, transform_indices = @transform_2, window_bounds = array<i64: 1, 128>}, {transform_indices = @transform_3, window_bounds = array<i64: 2, 128>}]} {
    %c0 = arith.constant 0 : index
    %c0_0 = arith.constant 0 : index
    %c0_1 = arith.constant 0 : index
    %0 = vector.load %arg1[%c0, %c0_0, %c0_1] : memref<2x8x384xf32, #tpu.memory_space<vmem>>, vector<2x8x384xf32>
    %cst = arith.constant dense<0.000000e+00> : vector<2x384xf32>
    %1 = vector.multi_reduction <add>, %0, %cst [1] : vector<2x8x384xf32> to vector<2x384xf32>
    %cst_2 = arith.constant 1.250000e-01 : f32
    %2 = vector.broadcast %cst_2 : f32 to vector<2x384xf32>
    %3 = arith.mulf %1, %2 : vector<2x384xf32>
    %c0_3 = arith.constant 0 : index
    %c0_4 = arith.constant 0 : index
    %4 = vector.load %arg2[%c0_3, %c0_4] : memref<384x128xf32, #tpu.memory_space<vmem>>, vector<384x128xf32>
    %cst_5 = arith.constant dense<0.000000e+00> : vector<2x128xf32>
    %5 = tpu.matmul %3, %4, %cst_5 {dimension_numbers = #tpu.dot_dimension_numbers<[1], [0], [0], [1], [0, 0, 1, 1], [], []>} : vector<2x384xf32>, vector<384x128xf32>, vector<2x128xf32> -> vector<2x128xf32>
    %c0_6 = arith.constant 0 : index
    %c0_7 = arith.constant 0 : index
    %6 = vector.load %arg3[%c0_6, %c0_7] : memref<1x128xf32, #tpu.memory_space<vmem>>, vector<1x128xf32>
    %7 = vector.broadcast %6 : vector<1x128xf32> to vector<2x128xf32>
    %8 = arith.addf %5, %7 : vector<2x128xf32>
    %c0_8 = arith.constant 0 : index
    %c0_9 = arith.constant 0 : index
    %9 = vector.load %arg4[%c0_8, %c0_9] : memref<2x128xf32, #tpu.memory_space<vmem>>, vector<2x128xf32>
    tpu.vector_store %arg4[%c0_8, %c0_9], %8 {strides = array<i32>} : memref<2x128xf32, #tpu.memory_space<vmem>>, vector<2x128xf32>,
    return
  }
  func.func @transform_0(%arg0: i32) -> (i32, i32, i32) {
    %c0_i32 = arith.constant 0 : i32
    %c0_i32_0 = arith.constant 0 : i32
    %c0_i32_1 = arith.constant 0 : i32
    return %arg0, %c0_i32, %c0_i32_0 : i32, i32, i32
  }
  func.func @transform_1(%arg0: i32) -> (i32, i32) {
    %c0_i32 = arith.constant 0 : i32
    %c0_i32_0 = arith.constant 0 : i32
    %c0_i32_1 = arith.constant 0 : i32
    return %c0_i32, %c0_i32_0 : i32, i32
  }
  func.func @transform_2(%arg0: i32) -> (i32, i32) {
    %c0_i32 = arith.constant 0 : i32
    %c0_i32_0 = arith.constant 0 : i32
    %c0_i32_1 = arith.constant 0 : i32
    return %c0_i32, %c0_i32_0 : i32, i32
  }
  func.func @transform_3(%arg0: i32) -> (i32, i32) {
    %c0_i32 = arith.constant 0 : i32
    %c0_i32_0 = arith.constant 0 : i32
    return %arg0, %c0_i32 : i32, i32
  }
}

</mosaic_0001>

<llo_original>
// kernel: tpu_custom_call.1
$region0: #{tpu_custom_call.1}
  #allocation0 [shape = 'u32[]', space=smem, size = 0x4, offset = 0x4, fixed_abs, tag = 'smem constant byte address 0x4 - core index']
  #allocation1 [shape = 'u32[144,128]{1,0:T(1,128)}', space=vmem, size = 0x12000, scoped, tag = 'internal scratch']
  %s0 = inlined_call_operand.hbm [shape: f32[2,8,384], index: 0, kind: input, shape index: {}]
  %s1 = inlined_call_operand.hbm [shape: f32[384,128], index: 1, kind: input, shape index: {}]
  %s2 = inlined_call_operand.vmem [shape: f32[1,128], index: 2, kind: input, shape index: {}]
  %s3 = inlined_call_operand.hbm [shape: f32[2,128], index: 3, kind: output, shape index: {}]
  %s4 = sld [smem:[#allocation0]]
  $region30: #{tpu_custom_call.1} parent=0
    _
  %s6 = ssub.s32 1, %s4
  %s7 = scalar_select 0, %s6, %s4
  $region1: #{tpu_custom_call.1} parent=0
    #allocation2 [shape = 'u8[24576]{0}', space=vmem, size = 0x6000, scoped, tag = 'input window, operand 0, single buffered']
    #allocation3 [shape = 's32[1]{0}', space=sflag, size = 0x4, scoped, tag = 'scoped memory for tpu_custom_call.1']
    #allocation4 [shape = 's32[1]{0}', space=sflag, size = 0x4, scoped, tag = 'scoped memory for tpu_custom_call.1']
    #allocation5 [shape = 'u8[196608]{0}', space=vmem, size = 0x30000, scoped, tag = 'input window, operand 1, single buffered']
    #allocation6 [shape = 's32[1]{0}', space=sflag, size = 0x4, scoped, tag = 'scoped memory for tpu_custom_call.1']
    #allocation7 [shape = 'u8[1024]{0}', space=vmem, size = 0x400, scoped, tag = 'output window, operand 0, single buffered']
    %8 = vsyncpa [#allocation3], 0
    %9 = vsyncpa [#allocation6], 0
    %10 = vsyncpa [#allocation4], 0
    // Predicated region
    $region2: #{tpu_custom_call.1} parent=1 // pred_check
      _
    $region3: #{tpu_custom_call.1} parent=1 // pred_check_branch
      %12 = sbr.rel (0) target = $region5
    $region4: #{tpu_custom_call.1} parent=1 // pred_region
      %s14 = ssub.s32 768, 768
      %15 = vsyncadd [#allocation3], %s14
      %s16 = sshll.u32 [#allocation2], 4
      %s17 = int_to_ptr.vmem [resolvable:$true] %s16
      %22 = dma.hbm_to_vmem [thread:$0]  %s0, 768, %s17, [#allocation3], 384, 384, 24
    $region5: #{tpu_custom_call.1} parent=1 // pred_fallthru
      _
    // Predicated region
    $region6: #{tpu_custom_call.1} parent=1 // pred_check
      _
    $region7: #{tpu_custom_call.1} parent=1 // pred_check_branch
      %24 = sbr.rel (0) target = $region9
    $region8: #{tpu_custom_call.1} parent=1 // pred_region
      %s26 = ssub.s32 6144, 6144
      %27 = vsyncadd [#allocation6], %s26
      %s28 = sshll.u32 [#allocation5], 4
      %s29 = int_to_ptr.vmem [resolvable:$true] %s28
      %34 = dma.hbm_to_vmem [thread:$0]  %s1, 6144, %s29, [#allocation6], 128, 128, 8
    $region9: #{tpu_custom_call.1} parent=1 // pred_fallthru
      _
    // Predicated region
    $region10: #{tpu_custom_call.1} parent=1 // pred_check
      _
    $region11: #{tpu_custom_call.1} parent=1 // pred_check_branch
      %36 = sbr.rel (0) target = $region13
    $region12: #{tpu_custom_call.1} parent=1 // pred_region
      _
    $region13: #{tpu_custom_call.1} parent=1 // pred_fallthru
      _
    // Predicated region
    $region14: #{tpu_custom_call.1} parent=1 // pred_check
      _
    $region15: #{tpu_custom_call.1} parent=1 // pred_check_branch
      %38 = sbr.rel (0) target = $region17
    $region16: #{tpu_custom_call.1} parent=1 // pred_region
      %39 = dma.done [#allocation3], 768
    $region17: #{tpu_custom_call.1} parent=1 // pred_fallthru
      _
    // Predicated region
    $region18: #{tpu_custom_call.1} parent=1 // pred_check
      _
    $region19: #{tpu_custom_call.1} parent=1 // pred_check_branch
      %41 = sbr.rel (0) target = $region21
    $region20: #{tpu_custom_call.1} parent=1 // pred_region
      %42 = dma.done [#allocation6], 6144
    $region21: #{tpu_custom_call.1} parent=1 // pred_fallthru
      _
    %v43 = vld [vmem:[#allocation2] sm:$0xff]
    %v44 = vld [vmem:[#allocation2 + $0x8] sm:$0xff]
    %v45 = vld [vmem:[#allocation2 + $0x10] sm:$0xff]
    %v46 = vld [vmem:[#allocation2 + $0x18] sm:$0xff]
    %v47 = vld [vmem:[#allocation2 + $0x20] sm:$0xff]
    %v48 = vld [vmem:[#allocation2 + $0x28] sm:$0xff]
    %v49 = vrot.slane %v43, 4
    %v50 = vadd.f32 %v43, %v49
    %v51 = vrot.slane %v50, 2
    %v52 = vadd.f32 %v50, %v51
    %v53 = vrot.slane %v52, 1
    %v54 = vadd.f32 %v52, %v53
    %v55 = vrot.slane %v44, 4
    %v56 = vadd.f32 %v44, %v55
    %v57 = vrot.slane %v56, 2
    %v58 = vadd.f32 %v56, %v57
    %v59 = vrot.slane %v58, 1
    %v60 = vadd.f32 %v58, %v59
    %v61 = vrot.slane %v45, 4
    %v62 = vadd.f32 %v45, %v61
    %v63 = vrot.slane %v62, 2
    %v64 = vadd.f32 %v62, %v63
    %v65 = vrot.slane %v64, 1
    %v66 = vadd.f32 %v64, %v65
    %v67 = vrot.slane %v46, 4
    %v68 = vadd.f32 %v46, %v67
    %v69 = vrot.slane %v68, 2
    %v70 = vadd.f32 %v68, %v69
    %v71 = vrot.slane %v70, 1
    %v72 = vadd.f32 %v70, %v71
    %v73 = vrot.slane %v47, 4
    %v74 = vadd.f32 %v47, %v73
    %v75 = vrot.slane %v74, 2
    %v76 = vadd.f32 %v74, %v75
    %v77 = vrot.slane %v76, 1
    %v78 = vadd.f32 %v76, %v77
    %v79 = vrot.slane %v48, 4
    %v80 = vadd.f32 %v48, %v79
    %v81 = vrot.slane %v80, 2
    %v82 = vadd.f32 %v80, %v81
    %v83 = vrot.slane %v82, 1
    %v84 = vadd.f32 %v82, %v83
    %v85 = vmul.f32 %v54, 0.125
    %v86 = vmul.f32 %v60, 0.125
    %v87 = vmul.f32 %v66, 0.125
    %v88 = vmul.f32 %v72, 0.125
    %v89 = vmul.f32 %v78, 0.125
    %v90 = vmul.f32 %v84, 0.125
    %v91 = vld [vmem:[#allocation5] sm:$0xff]
    %v92 = vld [vmem:[#allocation5 + $0x8] sm:$0xff]
    %v93 = vld [vmem:[#allocation5 + $0x10] sm:$0xff]
    %v94 = vld [vmem:[#allocation5 + $0x18] sm:$0xff]
    %v95 = vld [vmem:[#allocation5 + $0x20] sm:$0xff]
    %v96 = vld [vmem:[#allocation5 + $0x28] sm:$0xff]
    %v97 = vld [vmem:[#allocation5 + $0x30] sm:$0xff]
    %v98 = vld [vmem:[#allocation5 + $0x38] sm:$0xff]
    %v99 = vld [vmem:[#allocation5 + $0x40] sm:$0xff]
    %v100 = vld [vmem:[#allocation5 + $0x48] sm:$0xff]
    %v101 = vld [vmem:[#allocation5 + $0x50] sm:$0xff]
    %v102 = vld [vmem:[#allocation5 + $0x58] sm:$0xff]
    %v103 = vld [vmem:[#allocation5 + $0x60] sm:$0xff]
    %v104 = vld [vmem:[#allocation5 + $0x68] sm:$0xff]
    %v105 = vld [vmem:[#allocation5 + $0x70] sm:$0xff]
    %v106 = vld [vmem:[#allocation5 + $0x78] sm:$0xff]
    %v107 = vld [vmem:[#allocation5 + $0x80] sm:$0xff]
    %v108 = vld [vmem:[#allocation5 + $0x88] sm:$0xff]
    %v109 = vld [vmem:[#allocation5 + $0x90] sm:$0xff]
    %v110 = vld [vmem:[#allocation5 + $0x98] sm:$0xff]
    %v111 = vld [vmem:[#allocation5 + $0xa0] sm:$0xff]
    %v112 = vld [vmem:[#allocation5 + $0xa8] sm:$0xff]
    %v113 = vld [vmem:[#allocation5 + $0xb0] sm:$0xff]
    %v114 = vld [vmem:[#allocation5 + $0xb8] sm:$0xff]
    %v115 = vld [vmem:[#allocation5 + $0xc0] sm:$0xff]
    %v116 = vld [vmem:[#allocation5 + $0xc8] sm:$0xff]
    %v117 = vld [vmem:[#allocation5 + $0xd0] sm:$0xff]
    %v118 = vld [vmem:[#allocation5 + $0xd8] sm:$0xff]
    %v119 = vld [vmem:[#allocation5 + $0xe0] sm:$0xff]
    %v120 = vld [vmem:[#allocation5 + $0xe8] sm:$0xff]
    %v121 = vld [vmem:[#allocation5 + $0xf0] sm:$0xff]
    %v122 = vld [vmem:[#allocation5 + $0xf8] sm:$0xff]
    %v123 = vld [vmem:[#allocation5 + $0x100] sm:$0xff]
    %v124 = vld [vmem:[#allocation5 + $0x108] sm:$0xff]
    %v125 = vld [vmem:[#allocation5 + $0x110] sm:$0xff]
    %v126 = vld [vmem:[#allocation5 + $0x118] sm:$0xff]
    %v127 = vld [vmem:[#allocation5 + $0x120] sm:$0xff]
    %v128 = vld [vmem:[#allocation5 + $0x128] sm:$0xff]
    %v129 = vld [vmem:[#allocation5 + $0x130] sm:$0xff]
    %v130 = vld [vmem:[#allocation5 + $0x138] sm:$0xff]
    %v131 = vld [vmem:[#allocation5 + $0x140] sm:$0xff]
    %v132 = vld [vmem:[#allocation5 + $0x148] sm:$0xff]
    %v133 = vld [vmem:[#allocation5 + $0x150] sm:$0xff]
    %v134 = vld [vmem:[#allocation5 + $0x158] sm:$0xff]
    %v135 = vld [vmem:[#allocation5 + $0x160] sm:$0xff]
    %v136 = vld [vmem:[#allocation5 + $0x168] sm:$0xff]
    %v137 = vld [vmem:[#allocation5 + $0x170] sm:$0xff]
    %v138 = vld [vmem:[#allocation5 + $0x178] sm:$0xff]
    %v139 = vld [vmem:[%s2] sm:$0x1]
    %v141 = vlaneseq
    %v142 = vshrl.u32 %v141, 7
    %v143 = vsub.s32 0, %v142
    %v144 = vrot.slane %v139, %v143
    %vm152 = vcmask 1041409
    %v153 = vsel %vm152, %v88, %v85
    %v154 = vsel %vm152, %v89, %v86
    %v155 = vsel %vm152, %v90, %v87
    %159 = vmatprep.subr.mxu0 0.0
    %160 = vmatpush1.msra.mxu0 %v91
    %161 = vmatprep.subr.mxu0 0.0
    %162 = vmatpush1.msra.mxu0 %v92
    %163 = vmatprep.subr.mxu0 0.0
    %164 = vmatpush1.msra.mxu0 %v93
    %165 = vmatprep.subr.mxu0 0.0
    %166 = vmatpush1.msra.mxu0 %v94
    %167 = vmatprep.subr.mxu0 0.0
    %168 = vmatpush1.msra.mxu0 %v95
    %169 = vmatprep.subr.mxu0 0.0
    %170 = vmatpush1.msra.mxu0 %v96
    %171 = vmatprep.subr.mxu0 0.0
    %172 = vmatpush1.msra.mxu0 %v97
    %173 = vmatprep.subr.mxu0 0.0
    %174 = vmatpush1.msra.mxu0 %v98
    %175 = vmatprep.subr.mxu0 0.0
    %176 = vmatpush1.msra.mxu0 %v99
    %177 = vmatprep.subr.mxu0 0.0
    %178 = vmatpush1.msra.mxu0 %v100
    %179 = vmatprep.subr.mxu0 0.0
    %180 = vmatpush1.msra.mxu0 %v101
    %181 = vmatprep.subr.mxu0 0.0
    %182 = vmatpush1.msra.mxu0 %v102
    %183 = vmatprep.subr.mxu0 0.0
    %184 = vmatpush1.msra.mxu0 %v103
    %185 = vmatprep.subr.mxu0 0.0
    %186 = vmatpush1.msra.mxu0 %v104
    %187 = vmatprep.subr.mxu0 0.0
    %188 = vmatpush1.msra.mxu0 %v105
    %189 = vmatprep.subr.mxu0 0.0
    %190 = vmatpush1.msra.mxu0 %v106
    %191 = vmatprep.subr.mxu0 0.0
    %192 = vmatpush1.msra.mxu0 %v107
    %193 = vmatprep.subr.mxu0 0.0
    %194 = vmatpush1.msra.mxu0 %v108
    %195 = vmatprep.subr.mxu0 0.0
    %196 = vmatpush1.msra.mxu0 %v109
    %197 = vmatprep.subr.mxu0 0.0
    %198 = vmatpush1.msra.mxu0 %v110
    %199 = vmatprep.subr.mxu0 0.0
    %200 = vmatpush1.msra.mxu0 %v111
    %201 = vmatprep.subr.mxu0 0.0
    %202 = vmatpush1.msra.mxu0 %v112
    %203 = vmatprep.subr.mxu0 0.0
    %204 = vmatpush1.msra.mxu0 %v113
    %205 = vmatprep.subr.mxu0 0.0
    %206 = vmatpush1.msra.mxu0 %v114
    %207 = vmatprep.subr.mxu0 0.0
    %208 = vmatpush1.msra.mxu0 %v115
    %209 = vmatprep.subr.mxu0 0.0
    %210 = vmatpush1.msra.mxu0 %v116
    %211 = vmatprep.subr.mxu0 0.0
    %212 = vmatpush1.msra.mxu0 %v117
    %213 = vmatprep.subr.mxu0 0.0
    %214 = vmatpush1.msra.mxu0 %v118
    %215 = vmatprep.subr.mxu0 0.0
    %216 = vmatpush1.msra.mxu0 %v119
    %217 = vmatprep.subr.mxu0 0.0
    %218 = vmatpush1.msra.mxu0 %v120
    %219 = vmatprep.subr.mxu0 0.0
    %220 = vmatpush1.msra.mxu0 %v121
    %221 = vmatprep.subr.mxu0 0.0
    %222 = vmatpush1.msra.mxu0 %v122
    %223 = vmatprep.mubr.f32.mxu0 %v154
    %224 = vmatmul.mubr.f32.gmra.mrb[0].mxu0 %v153
    %v225 = vpop.f32.mrb[0].mxu0
    %v226 = vadd.f32 %v144, %v225
    %v227 = vpop.f32.mrb[0].mxu0
    %228 = vdwg.mxu0
    %229 = vmatprep.subr.mxu0 0.0
    %230 = vmatpush1.msra.mxu0 %v123
    %231 = vmatprep.subr.mxu0 0.0
    %232 = vmatpush1.msra.mxu0 %v124
    %233 = vmatprep.subr.mxu0 0.0
    %234 = vmatpush1.msra.mxu0 %v125
    %235 = vmatprep.subr.mxu0 0.0
    %236 = vmatpush1.msra.mxu0 %v126
    %237 = vmatprep.subr.mxu0 0.0
    %238 = vmatpush1.msra.mxu0 %v127
    %239 = vmatprep.subr.mxu0 0.0
    %240 = vmatpush1.msra.mxu0 %v128
    %241 = vmatprep.subr.mxu0 0.0
    %242 = vmatpush1.msra.mxu0 %v129
    %243 = vmatprep.subr.mxu0 0.0
    %244 = vmatpush1.msra.mxu0 %v130
    %245 = vmatprep.subr.mxu0 0.0
    %246 = vmatpush1.msra.mxu0 %v131
    %247 = vmatprep.subr.mxu0 0.0
    %248 = vmatpush1.msra.mxu0 %v132
    %249 = vmatprep.subr.mxu0 0.0
    %250 = vmatpush1.msra.mxu0 %v133
    %251 = vmatprep.subr.mxu0 0.0
    %252 = vmatpush1.msra.mxu0 %v134
    %253 = vmatprep.subr.mxu0 0.0
    %254 = vmatpush1.msra.mxu0 %v135
    %255 = vmatprep.subr.mxu0 0.0
    %256 = vmatpush1.msra.mxu0 %v136
    %257 = vmatprep.subr.mxu0 0.0
    %258 = vmatpush1.msra.mxu0 %v137
    %259 = vmatprep.subr.mxu0 0.0
    %260 = vmatpush1.msra.mxu0 %v138
    %261 = vmatprep.subr.mxu0 0.0
    %262 = vmatpush1.msra.mxu0 0.0
    %263 = vmatprep.subr.mxu0 0.0
    %264 = vmatpush1.msra.mxu0 0.0
    %265 = vmatprep.subr.mxu0 0.0
    %266 = vmatpush1.msra.mxu0 0.0
    %267 = vmatprep.subr.mxu0 0.0
    %268 = vmatpush1.msra.mxu0 0.0
    %269 = vmatprep.subr.mxu0 0.0
    %270 = vmatpush1.msra.mxu0 0.0
    %271 = vmatprep.subr.mxu0 0.0
    %272 = vmatpush1.msra.mxu0 0.0
    %273 = vmatprep.subr.mxu0 0.0
    %274 = vmatpush1.msra.mxu0 0.0
    %275 = vmatprep.subr.mxu0 0.0
    %276 = vmatpush1.msra.mxu0 0.0
    %277 = vmatprep.subr.mxu0 0.0
    %278 = vmatpush1.msra.mxu0 0.0
    %279 = vmatprep.subr.mxu0 0.0
    %280 = vmatpush1.msra.mxu0 0.0
    %281 = vmatprep.subr.mxu0 0.0
    %282 = vmatpush1.msra.mxu0 0.0
    %283 = vmatprep.subr.mxu0 0.0
    %284 = vmatpush1.msra.mxu0 0.0
    %285 = vmatprep.subr.mxu0 0.0
    %286 = vmatpush1.msra.mxu0 0.0
    %287 = vmatprep.subr.mxu0 0.0
    %288 = vmatpush1.msra.mxu0 0.0
    %289 = vmatprep.subr.mxu0 0.0
    %290 = vmatpush1.msra.mxu0 0.0
    %291 = vmatprep.subr.mxu0 0.0
    %292 = vmatpush1.msra.mxu0 0.0
    %293 = vmatprep.mubr.f32.mxu0 0.0
    %294 = vmatmul.mubr.f32.gmra.mrb[0].mxu0 %v155
    %v295 = vpop.f32.mrb[0].mxu0
    %v296 = vadd.f32 %v226, %v295
    %v297 = vpop.f32.mrb[0].mxu0
    %298 = vdwg.mxu0
    %299 = vst [vmem:[#allocation7] sm:$0x3] %v296
    // Predicated region
    $region22: #{tpu_custom_call.1} parent=1 // pred_check
      _
    $region23: #{tpu_custom_call.1} parent=1 // pred_check_branch
      %301 = sbr.rel (0) target = $region25
    $region24: #{tpu_custom_call.1} parent=1 // pred_region
      %s303 = ssub.s32 32, 32
      %304 = vsyncadd [#allocation4], %s303
      %s306 = sshll.u32 [#allocation7], 4
      %s307 = int_to_ptr.vmem [resolvable:$true] %s306
      %309 = dma.vmem_to_hbm [thread:$0]  %s307, 32, %s3, [#allocation4]
    $region25: #{tpu_custom_call.1} parent=1 // pred_fallthru
      _
    // Predicated region
    $region26: #{tpu_custom_call.1} parent=1 // pred_check
      _
    $region27: #{tpu_custom_call.1} parent=1 // pred_check_branch
      %311 = sbr.rel (0) target = $region29
    $region28: #{tpu_custom_call.1} parent=1 // pred_region
      %312 = dma.done [#allocation4], 32
    $region29: #{tpu_custom_call.1} parent=1 // pred_fallthru
      _
    %313 = vsyncpa [#allocation3], 1
    %314 = vsyncpa [#allocation6], 1
    %315 = vsyncpa [#allocation4], 1

</llo_original>
